<compile_context>
chip_gen: v7x
topology: tpu7x:2x2x1
jax: 0.10.0
libtpu: 0.0.40
codegen_flags: <defaults>
</compile_context>

<pallas_src>
import functools

import numpy as np
import jax
import jax.numpy as jnp
from jax.experimental import pallas as pl
from jax.experimental.pallas import tpu as pltpu


_MiB = 1024 * 1024


def _round_up(x, m):
    return ((x + m - 1) // m) * m


# ----------------------------- degree kernel --------------------------------------- #

def _degree_kernel(adj_ref, uadj_ref, d_ref, du_ref):
    # Row sums (degree vectors) for one row-tile of adj and U_adj.  Implemented as
    # ones(1, N) @ tile^T on the MXU: the result is already lane-dense (1, tile_rows),
    # so no sublane->lane relayout and an unmasked full-width store.
    # Operands are cast to bf16 IN-KERNEL (adjacency is DMA'd in its native, possibly
    # narrow, dtype); 0/1 entries are exact in bf16 and accumulation is f32.
    n_cols = adj_ref.shape[1]
    ones_row = jnp.ones((1, n_cols), jnp.bfloat16)
    dnums = (((1,), (1,)), ((), ()))            # contract the lane dims (A @ B^T form)
    a = adj_ref[...].astype(jnp.bfloat16)
    u = uadj_ref[...].astype(jnp.bfloat16)
    d_ref[...] = jax.lax.dot_general(ones_row, a, dnums,
                                     preferred_element_type=jnp.float32)
    du_ref[...] = jax.lax.dot_general(ones_row, u, dnums,
                                      preferred_element_type=jnp.float32)


def _pick_row_tile(n, itemsize, budget_bytes=24 * _MiB):
    """Row-tile size for the degree kernel.

    The lane-dense output block (1, tr) requires tr to be a multiple of 128 or tr == n,
    so candidates are 512/256/128 (shrunk to fit 2 inputs x 2 pipeline buffers inside the
    VMEM budget), with a full-matrix fallback only for small graphs and row padding for
    large N that is not a multiple of 128.  Returns (tile_rows, padded_row_count).
    """
    candidates = [t for t in (512, 256, 128) if n % t == 0]
    for tr in candidates:
        if 4 * tr * n * itemsize <= budget_bytes:       # 2 inputs x 2 buffers
            return tr, n
    if candidates:
        # TODO(synk): for extremely wide graphs add a column-tile ("arbitrary") axis with
        # a partial-sum accumulator instead of shrinking the row tile further.
        return candidates[-1], n
    if n <= 1024:
        return n, n                                     # tiny graph: one full block
    n_pad = _round_up(n, 128)
    for tr in (512, 256, 128):
        if n_pad % tr == 0 and 4 * tr * n * itemsize <= budget_bytes:
            return tr, n_pad
    return 128, n_pad


def compute_degrees(adj, u_adj):
    """D = adj.sum(1), D_ = U_adj.sum(1), returned as lane-dense float32 (N,) vectors."""
    n = adj.shape[0]
    itemsize = max(jnp.dtype(adj.dtype).itemsize, jnp.dtype(u_adj.dtype).itemsize)
    tr, n_rows = _pick_row_tile(n, itemsize)
    if n_rows != n:                                     # zero rows contribute degree 0
        adj = jnp.pad(adj, ((0, n_rows - n), (0, 0)))
        u_adj = jnp.pad(u_adj, ((0, n_rows - n), (0, 0)))
    grid = (n_rows // tr,)
    vmem_est = 4 * tr * n * itemsize + 4 * n_rows * 4 + 2 * _MiB
    vmem_limit = int(min(48 * _MiB, max(32 * _MiB, 2 * vmem_est)))
    d, du = pl.pallas_call(
        _degree_kernel,
        out_shape=(
            jax.ShapeDtypeStruct((1, n_rows), jnp.float32),
            jax.ShapeDtypeStruct((1, n_rows), jnp.float32),
        ),
        grid_spec=pltpu.PrefetchScalarGridSpec(
            num_scalar_prefetch=0,
            grid=grid,
            in_specs=[
                pl.BlockSpec((tr, n), lambda i: (i, 0)),
                pl.BlockSpec((tr, n), lambda i: (i, 0)),
            ],
            out_specs=(
                pl.BlockSpec((1, tr), lambda i: (0, i)),
                pl.BlockSpec((1, tr), lambda i: (0, i)),
            ),
        ),
        compiler_params=pltpu.CompilerParams(
            dimension_semantics=("parallel",),          # row tiles shard across TCs (v7x)
            vmem_limit_bytes=vmem_limit,
        ),
    )(adj, u_adj)
    return d[0, :n], du[0, :n]


# ----------------------------- batched pair-score kernel ---------------------------- #

def _pair_score_kernel(ids_ref, ht_ref, score_ref, hsum_ref, *, beta, mu):
    # grid = (pair tiles [parallel], node tiles [arbitrary / reduction, last]).
    # score[p] = sigmoid(beta * || (a ⊙ H)[u_p] + (a ⊙ H)[v_p] ||^2 - mu); `a` pre-folded.
    #   ids_ref : (2, tile_p) int32   row 0 = u, row 1 = v (0-based node ids)
    #   ht_ref  : (F_pad, tn) bf16    node tile of a-scaled H^T (nodes on lanes)
    #   hsum_ref: (F_pad, tile_p) f32 VMEM accumulator across node tiles
    nt = pl.program_id(1)
    n_tile = ht_ref.shape[1]
    tile_p = ids_ref.shape[1]

    @pl.when(nt == 0)
    def _():
        hsum_ref[...] = jnp.zeros_like(hsum_ref)

    node_base = nt * n_tile
    ids_u = ids_ref[0:1, :]                                        # (1, tile_p)
    ids_v = ids_ref[1:2, :]                                        # (1, tile_p)
    node_iota = node_base + jax.lax.broadcasted_iota(
        jnp.int32, (n_tile, tile_p), 0)
    # One-hot selection matrix built directly in bf16 (values 0/1/2 are exact).
    sel = ((node_iota == ids_u).astype(jnp.bfloat16)
           + (node_iota == ids_v).astype(jnp.bfloat16))            # (n_tile, tile_p)
    # Gather-as-matmul on the MXU (bf16 operands, f32 accumulation): column p of the
    # accumulator ends up as (a⊙H)[u_p] + (a⊙H)[v_p] after the last node tile.
    hsum_ref[...] += jnp.dot(ht_ref[...], sel,
                             preferred_element_type=jnp.float32)   # (F_pad, tile_p) f32

    @pl.when(nt == pl.num_programs(1) - 1)
    def _():
        hs = hsum_ref[...]
        s = jnp.sum(hs * hs, axis=0, keepdims=True)                # (1, tile_p) sublane reduce
        score_ref[...] = jax.nn.sigmoid(beta * s - mu)             # exp path on the EUP


def pair_scores(h_t, ids, beta, mu):
    """f(H[u], H[v]) for every (u, v) column of `ids`, in a single pallas_call.

    h_t : (F_pad, N_pad) bf16, a-scaled H^T; N_pad multiple of 128 (padded node columns
          are zero and never selected by any id).
    ids : (2, P_pad) int32, P_pad multiple of 512.
    """
    f_pad, n_pad = h_t.shape
    _, p_pad = ids.shape
    assert n_pad % 128 == 0 and p_pad % 512 == 0
    tile_p = 512 if p_pad >= 1024 else 256      # always >= 2 parallel steps (both v7x TCs)
    tn = next(t for t in (512, 256, 128) if n_pad % t == 0)
    grid = (p_pad // tile_p, n_pad // tn)

    vmem_est = (2 * f_pad * tn * 2              # H^T blocks (bf16, double buffered)
                + 2 * 2 * tile_p * 4            # ids blocks
                + 2 * tile_p * 4                # output blocks
                + f_pad * tile_p * 4            # accumulator scratch
                + tn * tile_p * 10              # sel + iota/compare temporaries
                + 2 * _MiB)
    vmem_limit = int(min(48 * _MiB, max(32 * _MiB, 2 * vmem_est)))

    kern = functools.partial(_pair_score_kernel, beta=float(beta), mu=float(mu))
    out = pl.pallas_call(
        kern,
        out_shape=jax.ShapeDtypeStruct((1, p_pad), jnp.float32),
        grid_spec=pltpu.PrefetchScalarGridSpec(
            num_scalar_prefetch=0,
            grid=grid,
            in_specs=[
                pl.BlockSpec((2, tile_p), lambda p, nt: (0, p)),    # pair ids
                pl.BlockSpec((f_pad, tn), lambda p, nt: (0, nt)),   # a-scaled H^T tile
            ],
            out_specs=pl.BlockSpec((1, tile_p), lambda p, nt: (0, p)),
            scratch_shapes=[pltpu.VMEM((f_pad, tile_p), jnp.float32)],
        ),
        compiler_params=pltpu.CompilerParams(
            dimension_semantics=("parallel", "arbitrary"),
            vmem_limit_bytes=vmem_limit,
        ),
    )(ids, h_t)
    return out[0]


# ----------------------------- forward (host glue + kernels) ------------------------ #

def negative_sample_forward(adj, U_adj, snapshot, H, a_vec, beta, mu,
                            seed=0, max_candidates=8):
    """Mirror of negative_sample.forward.

    Degree reductions and all score evaluations run in Pallas (2 kernel launches, 2
    device->host transfers total); the weighted negative sampling / rejection filtering
    stays on host (numpy RNG), with candidates pre-drawn and scored in one batch.
    """
    # D = adj.sum(1), D_ = U_adj.sum(1)  -- Pallas kernel (HBM-bandwidth-bound row sums)
    D, D_ = compute_degrees(adj, U_adj)
    D = np.asarray(jax.device_get(D))
    D_ = np.asarray(jax.device_get(D_))

    U_np = np.asarray(jax.device_get(U_adj)).astype(np.float32)
    snap = np.asarray(snapshot)
    data = tuple(map(tuple, snap))
    num_edges = snap.shape[0]
    zero_rows = np.argwhere(D_ == 0).reshape(-1)
    # Original code indexes [0] unconditionally (host crash if no zero-degree node).
    th = int(zero_rows[0]) + 1 if zero_rows.size else D_.shape[0] + 1
    rng = np.random.RandomState(seed)

    def sample_pair(i, j):
        di = float(D[i - 1])
        dj = float(D[j - 1])
        tot = di + dj
        if tot > 0.0:
            p = np.array([di, dj], dtype=np.float64) / tot
            p = p / p.sum()          # exact-sum guard: float32 ratios made choice() raise
        else:
            p = np.array([0.5, 0.5], dtype=np.float64)   # degenerate (both degrees zero)
        d = int(rng.choice(a=[j, i], size=1, replace=False, p=p).item())
        flag = 1 if d == j else 0
        cand = np.argwhere(U_np[d - 1] == 0).reshape(-1) + 1
        cand = cand[cand < th]
        cand = cand[cand != d]
        dn = int(rng.choice(a=cand, size=1, replace=False).item())
        if flag:
            return dn, d            # negative pair -> f(H[dn-1], H[d-1])
        return d, dn                # negative pair -> f(H[d-1],  H[dn-1])

    # Pre-draw K i.i.d. candidate negative pairs per edge (each draw follows the original
    # procedure); taking the first candidate with loss <= 0 reproduces the sequential
    # rejection loop without per-round device round trips.
    I = np.array([i for i, _ in data], dtype=np.int64)
    J = np.array([j for _, j in data], dtype=np.int64)
    K = int(max_candidates)
    A = np.zeros((K, num_edges), dtype=np.int64)
    B = np.zeros((K, num_edges), dtype=np.int64)
    for k in range(K):
        for e, (i, j) in enumerate(data):
            A[k, e], B[k, e] = sample_pair(int(i), int(j))

    # Single Pallas call: score the E positive pairs once plus all E*K candidates.
    n_nodes, feat = H.shape
    total_pairs = num_edges * (1 + K)
    p_pad = _round_up(total_pairs, 512)       # tile_p stays >= 256, stores fully unmasked
    u_idx = np.zeros(p_pad, dtype=np.int32)
    v_idx = np.zeros(p_pad, dtype=np.int32)
    u_idx[:num_edges] = I - 1
    v_idx[:num_edges] = J - 1
    u_idx[num_edges:total_pairs] = (A - 1).reshape(-1)
    v_idx[num_edges:total_pairs] = (B - 1).reshape(-1)
    ids = jnp.asarray(np.stack([u_idx, v_idx], axis=0))          # (2, p_pad) int32

    # Fold the score parameter `a` into H^T once (a ⊙ (hi+hj) == column of (a⊙H^T)@sel)
    # and ship it in bf16 (MXU bf16 rate, half the VMEM traffic).  Scores stay f32.
    f_pad = _round_up(feat, 16)               # bf16 sublane packing
    n_pad = _round_up(n_nodes, 128)
    H_f32 = jnp.asarray(H, dtype=jnp.float32)
    a_row = jnp.asarray(a_vec, dtype=jnp.float32).reshape(-1)
    h_scaled = (a_row[None, :] * H_f32).T                         # (feat, n_nodes)
    h_t = jnp.zeros((f_pad, n_pad), jnp.bfloat16).at[:feat, :n_nodes].set(
        h_scaled.astype(jnp.bfloat16))

    scores = np.asarray(jax.device_get(pair_scores(h_t, ids, beta, mu)))

    f_pos = scores[:num_edges]                                   # computed exactly once
    f_neg = scores[num_edges:total_pairs].reshape(K, num_edges)
    loss_cand = f_pos[None, :] - f_neg                           # (K, E)
    accepted = loss_cand <= 0.0
    first_ok = np.argmax(accepted, axis=0)
    has_ok = accepted.any(axis=0)
    # TODO(synk): original code resamples in an unbounded `while loss > 0` loop; here the
    # data-dependent rejection is capped at max_candidates draws per edge (last draw is
    # kept if none is accepted).
    k_sel = np.where(has_ok, first_ok, K - 1)
    n_loss = loss_cand[k_sel, np.arange(num_edges)]
    return jnp.asarray(n_loss, dtype=jnp.float32)


# ----------------------------------- main ------------------------------------------- #

if __name__ == "__main__":
    N, F = 16, 32          # nodes, embedding dim
    key = jax.random.PRNGKey(0)
    k1, k2 = jax.random.split(key)
    H = jax.random.normal(k1, (N, F), dtype=jnp.float32)
    a_vec = 0.1 * jax.random.normal(k2, (1, F), dtype=jnp.float32)   # score param
    beta, mu = 0.5, 1.0                                               # score params

    # Snapshot edges (1-indexed node ids), 8 edges among nodes 1..9.
    edges = [(1, 2), (2, 3), (3, 4), (4, 5), (5, 6), (6, 7), (7, 8), (8, 9)]
    adj_np = np.zeros((N, N), dtype=np.float32)
    for i, j in edges:
        adj_np[i - 1, j - 1] = 1.0
        adj_np[j - 1, i - 1] = 1.0
    U_np = adj_np.copy()
    for i, j in [(1, 3), (2, 5), (4, 7)]:      # a few extra "global" edges
        U_np[i - 1, j - 1] = 1.0
        U_np[j - 1, i - 1] = 1.0
    # nodes 10..16 are isolated in U_adj -> th (first zero-degree node, 1-based) = 10

    # Ship adjacency in a narrow dtype: the degree pass is HBM-bandwidth bound and the
    # kernel casts in-register (0/1 values are exact in bf16).
    adj = jnp.asarray(adj_np, dtype=jnp.bfloat16)
    U_adj = jnp.asarray(U_np, dtype=jnp.bfloat16)
    snapshot = np.array(edges, dtype=np.int32)   # shape (8, 2)

    n_loss = negative_sample_forward(adj, U_adj, snapshot, H, a_vec, beta, mu)
    n_loss = jax.block_until_ready(n_loss)
    assert n_loss.shape == (len(edges),)
    assert np.all(np.isfinite(np.asarray(n_loss)))
    print("KERNEL_OK")
</pallas_src>

<mosaic_0001>
module attributes {stable_mosaic.version = 11 : i64} {
  func.func @_degree_kernel(%arg0: i32, %arg1: memref<16x16xbf16, #tpu.memory_space<vmem>>, %arg2: memref<16x16xbf16, #tpu.memory_space<vmem>>, %arg3: memref<1x16xf32, #tpu.memory_space<vmem>>, %arg4: memref<1x16xf32, #tpu.memory_space<vmem>>) attributes {dimension_semantics = [#tpu.dimension_semantics<parallel>], iteration_bounds = array<i64: 1>, scalar_prefetch = 0 : i64, scratch_operands = 0 : i64, tpu.core_type = #tpu.core_type<tc>, window_params = [{transform_indices = @transform_0, window_bounds = array<i64: 16, 16>}, {transform_indices = @transform_1, window_bounds = array<i64: 16, 16>}, {transform_indices = @transform_2, window_bounds = array<i64: 1, 16>}, {transform_indices = @transform_3, window_bounds = array<i64: 1, 16>}]} {
    %cst = arith.constant 1.000000e+00 : bf16
    %0 = vector.broadcast %cst : bf16 to vector<1x16xbf16>
    %c0 = arith.constant 0 : index
    %c0_0 = arith.constant 0 : index
    %1 = vector.load %arg1[%c0, %c0_0] : memref<16x16xbf16, #tpu.memory_space<vmem>>, vector<16x16xbf16>
    %c0_1 = arith.constant 0 : index
    %c0_2 = arith.constant 0 : index
    %2 = vector.load %arg2[%c0_1, %c0_2] : memref<16x16xbf16, #tpu.memory_space<vmem>>, vector<16x16xbf16>
    %cst_3 = arith.constant dense<0.000000e+00> : vector<1x16xf32>
    %3 = tpu.matmul %0, %1, %cst_3 {dimension_numbers = #tpu.dot_dimension_numbers<[1], [1], [0], [0], [0, 0, 1, 0], [], []>} : vector<1x16xbf16>, vector<16x16xbf16>, vector<1x16xf32> -> vector<1x16xf32>
    %c0_4 = arith.constant 0 : index
    %c0_5 = arith.constant 0 : index
    %4 = vector.load %arg3[%c0_4, %c0_5] : memref<1x16xf32, #tpu.memory_space<vmem>>, vector<1x16xf32>
    tpu.vector_store %arg3[%c0_4, %c0_5], %3 {strides = array<i32>} : memref<1x16xf32, #tpu.memory_space<vmem>>, vector<1x16xf32>,
    %cst_6 = arith.constant dense<0.000000e+00> : vector<1x16xf32>
    %5 = tpu.matmul %0, %2, %cst_6 {dimension_numbers = #tpu.dot_dimension_numbers<[1], [1], [0], [0], [0, 0, 1, 0], [], []>} : vector<1x16xbf16>, vector<16x16xbf16>, vector<1x16xf32> -> vector<1x16xf32>
    %c0_7 = arith.constant 0 : index
    %c0_8 = arith.constant 0 : index
    %6 = vector.load %arg4[%c0_7, %c0_8] : memref<1x16xf32, #tpu.memory_space<vmem>>, vector<1x16xf32>
    tpu.vector_store %arg4[%c0_7, %c0_8], %5 {strides = array<i32>} : memref<1x16xf32, #tpu.memory_space<vmem>>, vector<1x16xf32>,
    return
  }
  func.func @transform_0(%arg0: i32) -> (i32, i32) {
    %c0_i32 = arith.constant 0 : i32
    %c0_i32_0 = arith.constant 0 : i32
    return %arg0, %c0_i32 : i32, i32
  }
  func.func @transform_1(%arg0: i32) -> (i32, i32) {
    %c0_i32 = arith.constant 0 : i32
    %c0_i32_0 = arith.constant 0 : i32
    return %arg0, %c0_i32 : i32, i32
  }
  func.func @transform_2(%arg0: i32) -> (i32, i32) {
    %c0_i32 = arith.constant 0 : i32
    %c0_i32_0 = arith.constant 0 : i32
    return %c0_i32, %arg0 : i32, i32
  }
  func.func @transform_3(%arg0: i32) -> (i32, i32) {
    %c0_i32 = arith.constant 0 : i32
    %c0_i32_0 = arith.constant 0 : i32
    return %c0_i32, %arg0 : i32, i32
  }
}

</mosaic_0001>

<llo_original>
// kernel: tpu_custom_call.1
$region0: #{tpu_custom_call.1}
  #allocation0 [shape = 'u32[]', space=smem, size = 0x4, offset = 0x4, fixed_abs, tag = 'smem constant byte address 0x4 - core index']
  #allocation1 [shape = 'u32[144,128]{1,0:T(1,128)}', space=vmem, size = 0x12000, scoped, tag = 'internal scratch']
  %s0 = inlined_call_operand.hbm [shape: bf16[16,16], index: 0, kind: input, shape index: {}]
  %s1 = inlined_call_operand.hbm [shape: bf16[16,16], index: 1, kind: input, shape index: {}]
  %s2 = inlined_call_operand.hbm [shape: f32[1,16], index: 2, kind: output, shape index: {0}]
  %s3 = inlined_call_operand.hbm [shape: f32[1,16], index: 3, kind: output, shape index: {1}]
  %4 = xla_tuple %s2, %s3
  %s5 = sld [smem:[#allocation0]]
  $region34: #{tpu_custom_call.1} parent=0
    _
  %s7 = ssub.s32 1, %s5
  %s8 = scalar_select 0, %s7, %s5
  $region1: #{tpu_custom_call.1} parent=0
    #allocation2 [shape = 'u8[4096]{0}', space=vmem, size = 0x1000, scoped, tag = 'input window, operand 0, single buffered']
    #allocation3 [shape = 's32[1]{0}', space=sflag, size = 0x4, scoped, tag = 'scoped memory for tpu_custom_call.1']
    #allocation4 [shape = 's32[1]{0}', space=sflag, size = 0x4, scoped, tag = 'scoped memory for tpu_custom_call.1']
    #allocation5 [shape = 'u8[4096]{0}', space=vmem, size = 0x1000, scoped, tag = 'input window, operand 1, single buffered']
    #allocation6 [shape = 's32[1]{0}', space=sflag, size = 0x4, scoped, tag = 'scoped memory for tpu_custom_call.1']
    #allocation7 [shape = 'u8[512]{0}', space=vmem, size = 0x400, scoped, tag = 'output window, operand 0, single buffered']
    #allocation8 [shape = 'u8[512]{0}', space=vmem, size = 0x400, scoped, tag = 'output window, operand 1, single buffered']
    #allocation9 [shape = 's32[1]{0}', space=sflag, size = 0x4, scoped, tag = 'scoped memory for tpu_custom_call.1']
    %9 = vsyncpa [#allocation3], 0
    %10 = vsyncpa [#allocation6], 0
    %11 = vsyncpa [#allocation4], 0
    %12 = vsyncpa [#allocation9], 0
    // Predicated region
    $region2: #{tpu_custom_call.1} parent=1 // pred_check
      _
    $region3: #{tpu_custom_call.1} parent=1 // pred_check_branch
      %14 = sbr.rel (0) target = $region5
    $region4: #{tpu_custom_call.1} parent=1 // pred_region
      %s16 = ssub.s32 128, 128
      %17 = vsyncadd [#allocation3], %s16
      %s18 = sshll.u32 [#allocation2], 4
      %s19 = int_to_ptr.vmem [resolvable:$true] %s18
      %24 = dma.hbm_to_vmem [thread:$0]  %s0, 128, %s19, [#allocation3], 64, 64, 4
    $region5: #{tpu_custom_call.1} parent=1 // pred_fallthru
      _
    // Predicated region
    $region6: #{tpu_custom_call.1} parent=1 // pred_check
      _
    $region7: #{tpu_custom_call.1} parent=1 // pred_check_branch
      %26 = sbr.rel (0) target = $region9
    $region8: #{tpu_custom_call.1} parent=1 // pred_region
      %s28 = ssub.s32 128, 128
      %29 = vsyncadd [#allocation6], %s28
      %s30 = sshll.u32 [#allocation5], 4
      %s31 = int_to_ptr.vmem [resolvable:$true] %s30
      %36 = dma.hbm_to_vmem [thread:$0]  %s1, 128, %s31, [#allocation6], 64, 64, 4
    $region9: #{tpu_custom_call.1} parent=1 // pred_fallthru
      _
    // Predicated region
    $region10: #{tpu_custom_call.1} parent=1 // pred_check
      _
    $region11: #{tpu_custom_call.1} parent=1 // pred_check_branch
      %38 = sbr.rel (0) target = $region13
    $region12: #{tpu_custom_call.1} parent=1 // pred_region
      %39 = dma.done [#allocation3], 128
    $region13: #{tpu_custom_call.1} parent=1 // pred_fallthru
      _
    // Predicated region
    $region14: #{tpu_custom_call.1} parent=1 // pred_check
      _
    $region15: #{tpu_custom_call.1} parent=1 // pred_check_branch
      %41 = sbr.rel (0) target = $region17
    $region16: #{tpu_custom_call.1} parent=1 // pred_region
      %42 = dma.done [#allocation6], 128
    $region17: #{tpu_custom_call.1} parent=1 // pred_fallthru
      _
    %v45 = vld [vmem:[#allocation2] sm:$0xf]
    %v46 = vld [vmem:[#allocation2 + $0x4] sm:$0xf]
    %v47 = vld [vmem:[#allocation5] sm:$0xf]
    %v48 = vld [vmem:[#allocation5 + $0x4] sm:$0xf]
    %v51 = vunpack.c.l.b16 %v45
    %v52 = vunpack.c.l.b16 %v46
    %v53 = vpack.c.b16 %v52, %v51
    %vm54 = vcmask 130048
    %v56 = vsel %vm54, 1065369472, 0
    %v59 = vsel %vm54, %v53, 0
    %61 = vmatprep.subr.bf16.mxu0 0
    %62 = vmatpush1.bf16.xpose.msra.mxu0 %v59
    %63 = vmatprep.subr.bf16.mxu0 0
    %64 = vmatpush1.bf16.xpose.msra.mxu0 0
    %65 = vmatprep.subr.bf16.mxu0 0
    %66 = vmatpush1.bf16.xpose.msra.mxu0 0
    %67 = vmatprep.subr.bf16.mxu0 0
    %68 = vmatpush1.bf16.xpose.msra.mxu0 0
    %69 = vmatprep.subr.bf16.mxu0 0
    %70 = vmatpush1.bf16.xpose.msra.mxu0 0
    %71 = vmatprep.subr.bf16.mxu0 0
    %72 = vmatpush1.bf16.xpose.msra.mxu0 0
    %73 = vmatprep.subr.bf16.mxu0 0
    %74 = vmatpush1.bf16.xpose.msra.mxu0 0
    %75 = vmatprep.subr.bf16.mxu0 0
    %76 = vmatpush1.bf16.xpose.msra.mxu0 0
    %77 = vmatprep.subr.bf16.mxu0 0
    %78 = vmatpush1.bf16.xpose.msra.mxu0 0
    %79 = vmatprep.subr.bf16.mxu0 0
    %80 = vmatpush1.bf16.xpose.msra.mxu0 0
    %81 = vmatprep.subr.bf16.mxu0 0
    %82 = vmatpush1.bf16.xpose.msra.mxu0 0
    %83 = vmatprep.subr.bf16.mxu0 0
    %84 = vmatpush1.bf16.xpose.msra.mxu0 0
    %85 = vmatprep.subr.bf16.mxu0 0
    %86 = vmatpush1.bf16.xpose.msra.mxu0 0
    %87 = vmatprep.subr.bf16.mxu0 0
    %88 = vmatpush1.bf16.xpose.msra.mxu0 0
    %89 = vmatprep.subr.bf16.mxu0 0
    %90 = vmatpush1.bf16.xpose.msra.mxu0 0
    %91 = vmatprep.subr.bf16.mxu0 0
    %92 = vmatpush1.bf16.xpose.msra.mxu0 0
    %93 = vmatprep.mubr.bf16.mxu0 0
    %94 = vmatmul.mubr.bf16.gmra.mrb[0].mxu0 %v56
    %v95 = vpop.f32.mrb[0].mxu0
    %v96 = vadd.f32 0.0, %v95
    %v97 = vpop.f32.mrb[0].mxu0
    %v98 = vpop.f32.mrb[0].mxu0
    %v99 = vpop.f32.mrb[0].mxu0
    %100 = vdwg.mxu0
    %vm101 = vcmask 122880
    %102 = vst.msk [vmem:[#allocation7] sm:$0x1] %vm101, %v96
    %v105 = vunpack.c.l.b16 %v47
    %v106 = vunpack.c.l.b16 %v48
    %v107 = vpack.c.b16 %v106, %v105
    %v109 = vsel %vm54, %v107, 0
    %111 = vmatprep.subr.bf16.mxu0 0
    %112 = vmatpush1.bf16.xpose.msra.mxu0 %v109
    %113 = vmatprep.subr.bf16.mxu0 0
    %114 = vmatpush1.bf16.xpose.msra.mxu0 0
    %115 = vmatprep.subr.bf16.mxu0 0
    %116 = vmatpush1.bf16.xpose.msra.mxu0 0
    %117 = vmatprep.subr.bf16.mxu0 0
    %118 = vmatpush1.bf16.xpose.msra.mxu0 0
    %119 = vmatprep.subr.bf16.mxu0 0
    %120 = vmatpush1.bf16.xpose.msra.mxu0 0
    %121 = vmatprep.subr.bf16.mxu0 0
    %122 = vmatpush1.bf16.xpose.msra.mxu0 0
    %123 = vmatprep.subr.bf16.mxu0 0
    %124 = vmatpush1.bf16.xpose.msra.mxu0 0
    %125 = vmatprep.subr.bf16.mxu0 0
    %126 = vmatpush1.bf16.xpose.msra.mxu0 0
    %127 = vmatprep.subr.bf16.mxu0 0
    %128 = vmatpush1.bf16.xpose.msra.mxu0 0
    %129 = vmatprep.subr.bf16.mxu0 0
    %130 = vmatpush1.bf16.xpose.msra.mxu0 0
    %131 = vmatprep.subr.bf16.mxu0 0
    %132 = vmatpush1.bf16.xpose.msra.mxu0 0
    %133 = vmatprep.subr.bf16.mxu0 0
    %134 = vmatpush1.bf16.xpose.msra.mxu0 0
    %135 = vmatprep.subr.bf16.mxu0 0
    %136 = vmatpush1.bf16.xpose.msra.mxu0 0
    %137 = vmatprep.subr.bf16.mxu0 0
    %138 = vmatpush1.bf16.xpose.msra.mxu0 0
    %139 = vmatprep.subr.bf16.mxu0 0
    %140 = vmatpush1.bf16.xpose.msra.mxu0 0
    %141 = vmatprep.subr.bf16.mxu0 0
    %142 = vmatpush1.bf16.xpose.msra.mxu0 0
    %143 = vmatprep.mubr.bf16.mxu0 0
    %144 = vmatmul.mubr.bf16.gmra.mrb[0].mxu0 %v56
    %v145 = vpop.f32.mrb[0].mxu0
    %v146 = vadd.f32 0.0, %v145
    %v147 = vpop.f32.mrb[0].mxu0
    %v148 = vpop.f32.mrb[0].mxu0
    %v149 = vpop.f32.mrb[0].mxu0
    %150 = vdwg.mxu0
    %151 = vst.msk [vmem:[#allocation8] sm:$0x1] %vm101, %v146
    // Predicated region
    $region18: #{tpu_custom_call.1} parent=1 // pred_check
      _
    $region19: #{tpu_custom_call.1} parent=1 // pred_check_branch
      %153 = sbr.rel (0) target = $region21
    $region20: #{tpu_custom_call.1} parent=1 // pred_region
      %s155 = ssub.s32 16, 16
      %156 = vsyncadd [#allocation4], %s155
      %s158 = sshll.u32 [#allocation7], 4
      %s159 = int_to_ptr.vmem [resolvable:$true] %s158
      %161 = dma.vmem_to_hbm [thread:$0]  %s159, 16, %s2, [#allocation4]
    $region21: #{tpu_custom_call.1} parent=1 // pred_fallthru
      _
    // Predicated region
    $region22: #{tpu_custom_call.1} parent=1 // pred_check
      _
    $region23: #{tpu_custom_call.1} parent=1 // pred_check_branch
      %163 = sbr.rel (0) target = $region25
    $region24: #{tpu_custom_call.1} parent=1 // pred_region
      %s165 = ssub.s32 16, 16
      %166 = vsyncadd [#allocation9], %s165
      %s168 = sshll.u32 [#allocation8], 4
      %s169 = int_to_ptr.vmem [resolvable:$true] %s168
      %171 = dma.vmem_to_hbm [thread:$0]  %s169, 16, %s3, [#allocation9]
    $region25: #{tpu_custom_call.1} parent=1 // pred_fallthru
      _
    // Predicated region
    $region26: #{tpu_custom_call.1} parent=1 // pred_check
      _
    $region27: #{tpu_custom_call.1} parent=1 // pred_check_branch
      %173 = sbr.rel (0) target = $region29
    $region28: #{tpu_custom_call.1} parent=1 // pred_region
      %174 = dma.done [#allocation4], 16
    $region29: #{tpu_custom_call.1} parent=1 // pred_fallthru
      _
    // Predicated region
    $region30: #{tpu_custom_call.1} parent=1 // pred_check
      _
    $region31: #{tpu_custom_call.1} parent=1 // pred_check_branch
      %176 = sbr.rel (0) target = $region33
    $region32: #{tpu_custom_call.1} parent=1 // pred_region
      %177 = dma.done [#allocation9], 16
    $region33: #{tpu_custom_call.1} parent=1 // pred_fallthru
      _
    %178 = vsyncpa [#allocation3], 1
    %179 = vsyncpa [#allocation6], 1
    %180 = vsyncpa [#allocation4], 1
    %181 = vsyncpa [#allocation9], 1

</llo_original>
